<compile_context>
chip_gen: v5e
topology: v5e:2x2
jax: 0.10.0
libtpu: 0.0.40
codegen_flags: <defaults>
</compile_context>

<pallas_src>
import math
import numpy as np
import jax
import jax.numpy as jnp
from jax.experimental import pallas as pl
from jax.experimental.pallas import tpu as pltpu


def _round_up(x, m):
    return ((x + m - 1) // m) * m


# ----------------------------------------------------------------------------
# Mask construction: exact port of FullyConnectedSparseLayer.__init__.
# ----------------------------------------------------------------------------
def build_weight_canceler(size_in, size_out, coef):
    inp_section = int(size_in / coef)
    out_section = int(size_out / coef)
    canceler = np.zeros((size_out, size_in), dtype=np.float32)
    count = 0
    for i in range(size_out):
        canceler[i, count * inp_section: count * inp_section + inp_section] = 1.0
        if (i + 1) % out_section == 0:
            count = count + 1
    return canceler


# ----------------------------------------------------------------------------
# Pallas kernel: tiled x(B,K) @ Wmasked(K,N) with f32 accumulator scratch.
# kmap_ref is the scalar-prefetched (N_tiles, k_steps) -> K_tile index table.
# ----------------------------------------------------------------------------
def _sparse_linear_kernel(kmap_ref, x_ref, w_ref, b_ref, o_ref, acc_ref):
    del kmap_ref  # only used by the index_maps
    k = pl.program_id(2)

    @pl.when(k == 0)
    def _init():
        acc_ref[...] = jnp.zeros_like(acc_ref)

    acc_ref[...] += jnp.dot(x_ref[...], w_ref[...],
                            preferred_element_type=jnp.float32)

    @pl.when(k == pl.num_programs(2) - 1)
    def _finalize():
        o_ref[...] = (acc_ref[...] + b_ref[...]).astype(o_ref.dtype)


# ----------------------------------------------------------------------------
# Wrapper: mask folding, (K,N) layout, padding to lane-dense tiles, block-
# sparse K-tile schedule via scalar prefetch.
# ----------------------------------------------------------------------------
def fully_connected_sparse_layer(x, weights, canceler, bias, *,
                                 compute_dtype=jnp.float32,
                                 tile_m=None, tile_n=None, tile_k=None):
    """x: (B, K), weights: (N, K), canceler: (N, K) static 0/1, bias: (N,)."""
    B, K = x.shape
    N, K2 = weights.shape
    assert K == K2
    out_dtype = x.dtype

    # Fold the constant mask into the weights once and pre-transpose to (K, N)
    # so the MXU consumes it directly and output N is lane-dense.
    canceler_np = np.asarray(canceler, dtype=np.float32)  # static, trace-time
    w_masked_t = (jnp.asarray(weights, jnp.float32) *
                  jnp.asarray(canceler_np)).T              # (K, N)

    # Tile sizes: (8,128)-aligned, sized to fit v7x's 64 MiB VMEM comfortably.
    TM = tile_m or min(256, _round_up(B, 8))
    TN = tile_n or min(512, _round_up(N, 128))
    TK = tile_k or min(512, _round_up(K, 128))

    M_pad = _round_up(B, TM)
    N_pad = _round_up(N, TN)
    K_pad = _round_up(K, TK)

    x_p = jnp.zeros((M_pad, K_pad), compute_dtype).at[:B, :K].set(
        x.astype(compute_dtype))
    w_p = jnp.zeros((K_pad, N_pad), compute_dtype).at[:K, :N].set(
        w_masked_t.astype(compute_dtype))
    b_p = jnp.zeros((1, N_pad), jnp.float32).at[0, :N].set(
        bias.astype(jnp.float32))

    Mt, Nt, Kt = M_pad // TM, N_pad // TN, K_pad // TK

    # Structural sparsity: per-N-tile list of K tiles whose masked-weight block
    # contains any nonzero (static, derived from the canceler at trace time).
    mask_t_pad = np.zeros((K_pad, N_pad), dtype=np.float32)
    mask_t_pad[:K, :N] = canceler_np.T
    rows = []
    for j in range(Nt):
        nz = [k for k in range(Kt)
              if mask_t_pad[k * TK:(k + 1) * TK, j * TN:(j + 1) * TN].any()]
        rows.append(nz)
    k_steps = max(1, max(len(r) for r in rows))
    for r in rows:
        if len(r) < k_steps:
            # Pad with a K tile whose masked weights are all zero for this N
            # tile (contributes exactly 0 to the accumulator).
            zero_ks = [k for k in range(Kt) if k not in r]
            pad_k = zero_ks[0] if zero_ks else 0
            r.extend([pad_k] * (k_steps - len(r)))
    kmap = jnp.asarray(np.array(rows, dtype=np.int32))     # (Nt, k_steps)

    bytes_el = jnp.dtype(compute_dtype).itemsize
    cost = pl.CostEstimate(
        flops=2 * M_pad * TN * TK * Nt * k_steps,
        transcendentals=0,
        bytes_accessed=(Mt * Nt * k_steps * (TM * TK + TK * TN) * bytes_el
                        + M_pad * N_pad * 4 + N_pad * 4),
    )

    out = pl.pallas_call(
        _sparse_linear_kernel,
        out_shape=jax.ShapeDtypeStruct((M_pad, N_pad), jnp.float32),
        grid_spec=pltpu.PrefetchScalarGridSpec(
            num_scalar_prefetch=1,
            grid=(Mt, Nt, k_steps),
            in_specs=[
                # x tile: rows i, columns = scheduled K tile for this N tile.
                pl.BlockSpec((TM, TK), lambda i, j, k, kmap: (i, kmap[j, k])),
                # masked, transposed weight tile (K, N) layout — no .T needed.
                pl.BlockSpec((TK, TN), lambda i, j, k, kmap: (kmap[j, k], j)),
                # bias row for this N tile.
                pl.BlockSpec((1, TN), lambda i, j, k, kmap: (0, j)),
            ],
            out_specs=pl.BlockSpec((TM, TN), lambda i, j, k, kmap: (i, j)),
            scratch_shapes=[pltpu.VMEM((TM, TN), jnp.float32)],
        ),
        compiler_params=pltpu.CompilerParams(
            dimension_semantics=("parallel", "parallel", "arbitrary"),
            vmem_limit_bytes=48 * 1024 * 1024,
        ),
        cost_estimate=cost,
    )(kmap, x_p, w_p, b_p)

    return out[:B, :N].astype(out_dtype)


# ----------------------------------------------------------------------------
# Deterministic parameter init (mimics kaiming_uniform_ / fan-in uniform bias).
# ----------------------------------------------------------------------------
def init_params(key, size_in, size_out):
    kw, kb = jax.random.split(key)
    a = math.sqrt(5.0)
    fan_in = size_in
    gain = math.sqrt(2.0 / (1.0 + a * a))
    w_bound = gain * math.sqrt(3.0 / fan_in)
    weights = jax.random.uniform(
        kw, (size_out, size_in), minval=-w_bound, maxval=w_bound,
        dtype=jnp.float32)
    b_bound = 1.0 / math.sqrt(fan_in)
    bias = jax.random.uniform(
        kb, (size_out,), minval=-b_bound, maxval=b_bound, dtype=jnp.float32)
    return weights, bias


if __name__ == "__main__":
    key = jax.random.PRNGKey(0)

    def run_case(batch, size_in, size_out, coef, compute_dtype, tol, **tiles):
        k1, k2 = jax.random.split(jax.random.fold_in(key, size_in + size_out))
        x = jax.random.normal(k1, (batch, size_in), dtype=jnp.float32)
        weights, bias = init_params(k2, size_in, size_out)
        canceler = build_weight_canceler(size_in, size_out, coef)

        out = fully_connected_sparse_layer(
            x, weights, canceler, bias, compute_dtype=compute_dtype, **tiles)
        out = jax.block_until_ready(out)

        ref = x @ (weights * jnp.asarray(canceler)).T + bias
        assert out.shape == (batch, size_out)
        err = float(jnp.max(jnp.abs(out - ref)))
        assert err < tol, f"mismatch vs reference: max abs err = {err}"

    # Small config matching the module (single tile after padding to 128).
    run_case(batch=8, size_in=32, size_out=16, coef=4,
             compute_dtype=jnp.float32, tol=1e-5)

    # Multi-tile grid exercising the block-sparse K-tile skipping (coef blocks):
    # with 128x128 tiles each N tile only visits 1 of the 2 K tiles.
    run_case(batch=16, size_in=256, size_out=256, coef=2,
             compute_dtype=jnp.float32, tol=1e-4,
             tile_m=16, tile_n=128, tile_k=128)

    # bf16 inputs / masked weights (v6e / v7x MXU fast path), f32 accumulation.
    run_case(batch=16, size_in=256, size_out=256, coef=2,
             compute_dtype=jnp.bfloat16, tol=5e-2,
             tile_m=16, tile_n=128, tile_k=128)

    print("KERNEL_OK")
</pallas_src>

<mosaic_0001>
module attributes {stable_mosaic.version = 11 : i64} {
  func.func @_sparse_linear_kernel(%arg0: i32, %arg1: i32, %arg2: i32, %arg3: memref<1x1xi32, #tpu.memory_space<smem>>, %arg4: memref<8x128xf32, #tpu.memory_space<vmem>>, %arg5: memref<128x128xf32, #tpu.memory_space<vmem>>, %arg6: memref<1x128xf32, #tpu.memory_space<vmem>>, %arg7: memref<8x128xf32, #tpu.memory_space<vmem>>, %arg8: memref<8x128xf32, #tpu.memory_space<vmem>>) attributes {dimension_semantics = [#tpu.dimension_semantics<parallel>, #tpu.dimension_semantics<parallel>, #tpu.dimension_semantics<arbitrary>], iteration_bounds = array<i64: 1, 1, 1>, scalar_prefetch = 1 : i64, scratch_operands = 1 : i64, tpu.core_type = #tpu.core_type<tc>, window_params = [{transform_indices = @transform_0, window_bounds = array<i64: 8, 128>}, {transform_indices = @transform_1, window_bounds = array<i64: 128, 128>}, {transform_indices = @transform_2, window_bounds = array<i64: 1, 128>}, {transform_indices = @transform_3, window_bounds = array<i64: 8, 128>}]} {
    %c0_i32 = arith.constant 0 : i32
    %0 = arith.cmpi eq, %arg2, %c0_i32 : i32
    %1 = arith.extui %0 : i1 to i32
    %c0_i32_0 = arith.constant 0 : i32
    %2 = arith.cmpi ne, %1, %c0_i32_0 : i32
    scf.if %2 {
      %cst_10 = arith.constant 0.000000e+00 : f32
      %12 = vector.broadcast %cst_10 : f32 to vector<8x128xf32>
      %c0_11 = arith.constant 0 : index
      %c0_12 = arith.constant 0 : index
      %13 = vector.load %arg8[%c0_11, %c0_12] : memref<8x128xf32, #tpu.memory_space<vmem>>, vector<8x128xf32>
      tpu.vector_store %arg8[%c0_11, %c0_12], %12 {strides = array<i32>} : memref<8x128xf32, #tpu.memory_space<vmem>>, vector<8x128xf32>,
    } else {
    }
    %c0 = arith.constant 0 : index
    %c0_1 = arith.constant 0 : index
    %3 = vector.load %arg8[%c0, %c0_1] : memref<8x128xf32, #tpu.memory_space<vmem>>, vector<8x128xf32>
    %c0_2 = arith.constant 0 : index
    %c0_3 = arith.constant 0 : index
    %4 = vector.load %arg4[%c0_2, %c0_3] : memref<8x128xf32, #tpu.memory_space<vmem>>, vector<8x128xf32>
    %c0_4 = arith.constant 0 : index
    %c0_5 = arith.constant 0 : index
    %5 = vector.load %arg5[%c0_4, %c0_5] : memref<128x128xf32, #tpu.memory_space<vmem>>, vector<128x128xf32>
    %cst = arith.constant dense<0.000000e+00> : vector<8x128xf32>
    %6 = tpu.matmul %4, %5, %cst {dimension_numbers = #tpu.dot_dimension_numbers<[1], [0], [0], [1], [0, 0, 1, 1], [], []>} : vector<8x128xf32>, vector<128x128xf32>, vector<8x128xf32> -> vector<8x128xf32>
    %7 = arith.addf %3, %6 : vector<8x128xf32>
    %c0_6 = arith.constant 0 : index
    %c0_7 = arith.constant 0 : index
    %8 = vector.load %arg8[%c0_6, %c0_7] : memref<8x128xf32, #tpu.memory_space<vmem>>, vector<8x128xf32>
    tpu.vector_store %arg8[%c0_6, %c0_7], %7 {strides = array<i32>} : memref<8x128xf32, #tpu.memory_space<vmem>>, vector<8x128xf32>,
    %c0_i32_8 = arith.constant 0 : i32
    %9 = arith.cmpi eq, %arg2, %c0_i32_8 : i32
    %10 = arith.extui %9 : i1 to i32
    %c0_i32_9 = arith.constant 0 : i32
    %11 = arith.cmpi ne, %10, %c0_i32_9 : i32
    scf.if %11 {
      %c0_10 = arith.constant 0 : index
      %c0_11 = arith.constant 0 : index
      %12 = vector.load %arg8[%c0_10, %c0_11] : memref<8x128xf32, #tpu.memory_space<vmem>>, vector<8x128xf32>
      %c0_12 = arith.constant 0 : index
      %c0_13 = arith.constant 0 : index
      %13 = vector.load %arg6[%c0_12, %c0_13] : memref<1x128xf32, #tpu.memory_space<vmem>>, vector<1x128xf32>
      %14 = vector.broadcast %13 : vector<1x128xf32> to vector<8x128xf32>
      %15 = arith.addf %12, %14 : vector<8x128xf32>
      %c0_14 = arith.constant 0 : index
      %c0_15 = arith.constant 0 : index
      %16 = vector.load %arg7[%c0_14, %c0_15] : memref<8x128xf32, #tpu.memory_space<vmem>>, vector<8x128xf32>
      tpu.vector_store %arg7[%c0_14, %c0_15], %15 {strides = array<i32>} : memref<8x128xf32, #tpu.memory_space<vmem>>, vector<8x128xf32>,
    } else {
    }
    return
  }
  func.func @transform_0(%arg0: i32, %arg1: i32, %arg2: i32, %arg3: memref<1x1xi32, #tpu.memory_space<smem>>) -> (i32, i32) {
    %0 = arith.index_cast %arg1 : i32 to index
    %1 = arith.index_cast %arg2 : i32 to index
    %2 = memref.load %arg3[%0, %1] : memref<1x1xi32, #tpu.memory_space<smem>>
    %c0_i32 = arith.constant 0 : i32
    return %arg0, %2 : i32, i32
  }
  func.func @transform_1(%arg0: i32, %arg1: i32, %arg2: i32, %arg3: memref<1x1xi32, #tpu.memory_space<smem>>) -> (i32, i32) {
    %0 = arith.index_cast %arg1 : i32 to index
    %1 = arith.index_cast %arg2 : i32 to index
    %2 = memref.load %arg3[%0, %1] : memref<1x1xi32, #tpu.memory_space<smem>>
    %c0_i32 = arith.constant 0 : i32
    return %2, %arg1 : i32, i32
  }
  func.func @transform_2(%arg0: i32, %arg1: i32, %arg2: i32, %arg3: memref<1x1xi32, #tpu.memory_space<smem>>) -> (i32, i32) {
    %c0_i32 = arith.constant 0 : i32
    %c0_i32_0 = arith.constant 0 : i32
    return %c0_i32, %arg1 : i32, i32
  }
  func.func @transform_3(%arg0: i32, %arg1: i32, %arg2: i32, %arg3: memref<1x1xi32, #tpu.memory_space<smem>>) -> (i32, i32) {
    %c0_i32 = arith.constant 0 : i32
    return %arg0, %arg1 : i32, i32
  }
}

</mosaic_0001>

<llo_original>
// kernel: tpu_custom_call.1
$region0: #{tpu_custom_call.1}
  #allocation0 [shape = 'u32[]', space=smem, size = 0x4, offset = 0x4, fixed_abs, tag = 'smem constant byte address 0x4 - core index']
  #allocation1 [shape = 'u32[72,128]{1,0:T(1,128)}', space=vmem, size = 0x9000, scoped, tag = 'internal scratch']
  #allocation2 [shape = 'f32[8,128]{1,0:T(8,128)}', space=vmem, size = 0x1000, scoped, tag = 'scratch operand']
  #allocation3 [shape = 's32[1]{0}', space=sflag, size = 0x4, scoped, tag = 'scoped memory for tpu_custom_call.1']
  #allocation4 [shape = 's32[1,1]{1,0:T(1,128)S(6)}', space=smem, size = 0x200, scoped, tag = 'prefetched SMEM operand 0']
  %s0 = inlined_call_operand.<no memory space> [shape: s32[1,1], index: 0, kind: input, shape index: {}]
  %s1 = inlined_call_operand.hbm [shape: f32[8,128], index: 1, kind: input, shape index: {}]
  %s2 = inlined_call_operand.hbm [shape: f32[128,128], index: 2, kind: input, shape index: {}]
  %s3 = inlined_call_operand.vmem [shape: f32[1,128], index: 3, kind: input, shape index: {}]
  %s4 = inlined_call_operand.hbm [shape: f32[8,128], index: 4, kind: output, shape index: {}]
  %s5 = sld [smem:[#allocation0]]
  $region38: #{tpu_custom_call.1} parent=0
    _
  %s7 = ssub.s32 1, %s5
  %s8 = scalar_select 0, %s7, %s5
  %9 = sst [smem:[#allocation4]] %s0
  $region1: #{tpu_custom_call.1} parent=0
    #allocation5 [shape = 'u8[4096]{0}', space=vmem, size = 0x1000, scoped, tag = 'input window, operand 1, single buffered']
    #allocation6 [shape = 's32[1]{0}', space=sflag, size = 0x4, scoped, tag = 'scoped memory for tpu_custom_call.1']
    #allocation7 [shape = 's32[1]{0}', space=sflag, size = 0x4, scoped, tag = 'scoped memory for tpu_custom_call.1']
    #allocation8 [shape = 'u8[65536]{0}', space=vmem, size = 0x10000, scoped, tag = 'input window, operand 2, single buffered']
    #allocation9 [shape = 's32[1]{0}', space=sflag, size = 0x4, scoped, tag = 'scoped memory for tpu_custom_call.1']
    #allocation10 [shape = 'u8[4096]{0}', space=vmem, size = 0x1000, scoped, tag = 'output window, operand 0, single buffered']
    %10 = vsyncpa [#allocation6], 0
    %11 = vsyncpa [#allocation9], 0
    %12 = vsyncpa [#allocation7], 0
    // Predicated region
    $region2: #{tpu_custom_call.1} parent=1 // pred_check
      _
    $region3: #{tpu_custom_call.1} parent=1 // pred_check_branch
      %14 = sbr.rel (0) target = $region5
    $region4: #{tpu_custom_call.1} parent=1 // pred_region
      %s15 = sadd.s32 0, 0
      %s16 = smul.u32 %s15, 128
      %s17 = sadd.s32 %s16, 0
      %s18 = sld [smem:[#allocation4 + %s17]]
      %20 = vsyncadd [#allocation6], 0
      %s21 = smul.addr %s18, 8
      %s22 = scalar_lea.hbm %s1, %s21
      %s24 = sshll.u32 %s22, 4
      %s25 = int_to_ptr.hbm [resolvable:$true] %s24
      %s26 = sshll.u32 [#allocation5], 4
      %s27 = int_to_ptr.vmem [resolvable:$true] %s26
      %29 = dma.hbm_to_vmem [thread:$0]  %s25, 128, %s27, [#allocation6]
    $region5: #{tpu_custom_call.1} parent=1 // pred_fallthru
      _
    // Predicated region
    $region6: #{tpu_custom_call.1} parent=1 // pred_check
      _
    $region7: #{tpu_custom_call.1} parent=1 // pred_check_branch
      %31 = sbr.rel (0) target = $region9
    $region8: #{tpu_custom_call.1} parent=1 // pred_region
      %s32 = sadd.s32 0, 0
      %s33 = smul.u32 %s32, 128
      %s34 = sadd.s32 %s33, 0
      %s35 = sld [smem:[#allocation4 + %s34]]
      %s36 = smul.u32 16, %s35
      %38 = vsyncadd [#allocation9], 0
      %s39 = smul.addr %s36, 8
      %s40 = scalar_lea.hbm %s2, %s39
      %s41 = sshll.u32 %s40, 4
      %s42 = int_to_ptr.hbm [resolvable:$true] %s41
      %s43 = sshll.u32 [#allocation8], 4
      %s44 = int_to_ptr.vmem [resolvable:$true] %s43
      %49 = dma.hbm_to_vmem [thread:$0]  %s42, 2048, %s44, [#allocation9], 128, 128, 8
    $region9: #{tpu_custom_call.1} parent=1 // pred_fallthru
      _
    // Predicated region
    $region10: #{tpu_custom_call.1} parent=1 // pred_check
      _
    $region11: #{tpu_custom_call.1} parent=1 // pred_check_branch
      %51 = sbr.rel (0) target = $region13
    $region12: #{tpu_custom_call.1} parent=1 // pred_region
      _
    $region13: #{tpu_custom_call.1} parent=1 // pred_fallthru
      _
    // Predicated region
    $region14: #{tpu_custom_call.1} parent=1 // pred_check
      _
    $region15: #{tpu_custom_call.1} parent=1 // pred_check_branch
      %53 = sbr.rel (0) target = $region17
    $region16: #{tpu_custom_call.1} parent=1 // pred_region
      %55 = dma.done [#allocation6], 128
    $region17: #{tpu_custom_call.1} parent=1 // pred_fallthru
      _
    // Predicated region
    $region18: #{tpu_custom_call.1} parent=1 // pred_check
      _
    $region19: #{tpu_custom_call.1} parent=1 // pred_check_branch
      %57 = sbr.rel (0) target = $region21
    $region20: #{tpu_custom_call.1} parent=1 // pred_region
      %59 = dma.done [#allocation9], 2048
    $region21: #{tpu_custom_call.1} parent=1 // pred_fallthru
      _
    %s60 = sadd.s32 0, 0
    %s61 = smul.u32 %s60, 128
    %s62 = sadd.s32 %s61, 0
    %s63 = sld [smem:[#allocation4 + %s62]]
    %s64 = sadd.s32 0, 0
    %s65 = smul.u32 %s64, 128
    %s66 = sadd.s32 %s65, 0
    %s67 = sld [smem:[#allocation4 + %s66]]
    %s68 = smul.u32 16, %s67
    %p69 = scmp.eq.s32.totalorder 0, 0
    // Predicated region
    $region22: #{tpu_custom_call.1} parent=1 // pred_check
      %p70 = pneg %p69
    $region23: #{tpu_custom_call.1} parent=1 // pred_check_branch
      %72 = sbr.rel (%p70) target = $region25
    $region24: #{tpu_custom_call.1} parent=1 // pred_region
      %73 = vst [vmem:[#allocation2] sm:$0xff] 0.0
    $region25: #{tpu_custom_call.1} parent=1 // pred_fallthru
      _
    %v74 = vld [vmem:[#allocation2] sm:$0xff]
    %v75 = vld [vmem:[#allocation5] sm:$0xff]
    %v76 = vld [vmem:[#allocation8] sm:$0xff]
    %v77 = vld [vmem:[#allocation8 + $0x8] sm:$0xff]
    %v78 = vld [vmem:[#allocation8 + $0x10] sm:$0xff]
    %v79 = vld [vmem:[#allocation8 + $0x18] sm:$0xff]
    %v80 = vld [vmem:[#allocation8 + $0x20] sm:$0xff]
    %v81 = vld [vmem:[#allocation8 + $0x28] sm:$0xff]
    %v82 = vld [vmem:[#allocation8 + $0x30] sm:$0xff]
    %v83 = vld [vmem:[#allocation8 + $0x38] sm:$0xff]
    %v84 = vld [vmem:[#allocation8 + $0x40] sm:$0xff]
    %v85 = vld [vmem:[#allocation8 + $0x48] sm:$0xff]
    %v86 = vld [vmem:[#allocation8 + $0x50] sm:$0xff]
    %v87 = vld [vmem:[#allocation8 + $0x58] sm:$0xff]
    %v88 = vld [vmem:[#allocation8 + $0x60] sm:$0xff]
    %v89 = vld [vmem:[#allocation8 + $0x68] sm:$0xff]
    %v90 = vld [vmem:[#allocation8 + $0x70] sm:$0xff]
    %v91 = vld [vmem:[#allocation8 + $0x78] sm:$0xff]
    %92 = vmatpush.msra.mxu0 %v91
    %93 = vmatpush.msra.mxu0 %v90
    %94 = vmatpush.msra.mxu0 %v89
    %95 = vmatpush.msra.mxu0 %v88
    %96 = vmatpush.msra.mxu0 %v87
    %97 = vmatpush.msra.mxu0 %v86
    %98 = vmatpush.msra.mxu0 %v85
    %99 = vmatpush.msra.mxu0 %v84
    %100 = vmatpush.msra.mxu0 %v83
    %101 = vmatpush.msra.mxu0 %v82
    %102 = vmatpush.msra.mxu0 %v81
    %103 = vmatpush.msra.mxu0 %v80
    %104 = vmatpush.msra.mxu0 %v79
    %105 = vmatpush.msra.mxu0 %v78
    %106 = vmatpush.msra.mxu0 %v77
    %107 = vmatpush.msra.mxu0 %v76
    %108 = vmatmul.f32.gmra.mxu0 %v75
    %v109 = vpop.f32.mrf.mxu0
    %v110 = vadd.f32 0.0, %v109
    %111 = vdwg.mxu0
    %v112 = vadd.f32 %v74, %v110
    %113 = vst [vmem:[#allocation2] sm:$0xff] %v112
    // Predicated region
    $region26: #{tpu_custom_call.1} parent=1 // pred_check
      %p114 = pneg %p69
    $region27: #{tpu_custom_call.1} parent=1 // pred_check_branch
      %116 = sbr.rel (%p114) target = $region29
    $region28: #{tpu_custom_call.1} parent=1 // pred_region
      %v117 = vld [vmem:[#allocation2] sm:$0xff]
      %v118 = vld [vmem:[%s3] sm:$0x1]
      %v120 = vperm.slane %v118, 0
      %v122 = vadd.f32 %v117, %v120
      %123 = vst [vmem:[#allocation10] sm:$0xff] %v122
    $region29: #{tpu_custom_call.1} parent=1 // pred_fallthru
      _
    // Predicated region
    $region30: #{tpu_custom_call.1} parent=1 // pred_check
      _
    $region31: #{tpu_custom_call.1} parent=1 // pred_check_branch
      %125 = sbr.rel (0) target = $region33
    $region32: #{tpu_custom_call.1} parent=1 // pred_region
      %127 = vsyncadd [#allocation7], 0
      %s129 = sshll.u32 [#allocation10], 4
      %s130 = int_to_ptr.vmem [resolvable:$true] %s129
      %s131 = sshll.u32 %s4, 4
      %s132 = int_to_ptr.hbm [resolvable:$true] %s131
      %134 = dma.vmem_to_hbm [thread:$0]  %s130, 128, %s132, [#allocation7]
    $region33: #{tpu_custom_call.1} parent=1 // pred_fallthru
      _
    // Predicated region
    $region34: #{tpu_custom_call.1} parent=1 // pred_check
      _
    $region35: #{tpu_custom_call.1} parent=1 // pred_check_branch
      %136 = sbr.rel (0) target = $region37
    $region36: #{tpu_custom_call.1} parent=1 // pred_region
      %138 = dma.done [#allocation7], 128
    $region37: #{tpu_custom_call.1} parent=1 // pred_fallthru
      _
    %139 = vsyncpa [#allocation6], 1
    %140 = vsyncpa [#allocation9], 1
    %141 = vsyncpa [#allocation7], 1

</llo_original>
